<compile_context>
chip_gen: v6e
topology: v6e:2x2x1
jax: 0.10.0
libtpu: 0.0.40
codegen_flags: <defaults>
</compile_context>

<pallas_src>
import jax
import jax.numpy as jnp
from jax import lax
from jax.experimental import pallas as pl
from jax.experimental.pallas import tpu as pltpu

_GROUPS = 4


def _round_up(x, m):
    return ((x + m - 1) // m) * m


def classifier_kernel(x_ref, w1_ref, p1_ref, w2_ref, p2_ref, w3_ref, b3_ref,
                      sel_ref, bcast_ref, out_ref):
    eps = jnp.float32(1e-5)
    mxu_dt = w1_ref.dtype                      # bf16 (or f32) MXU operand dtype

    sel = sel_ref[...]                         # (H, G) f32: group-mean selector (1/S entries)
    bcast = bcast_ref[...]                     # (G, H) f32: group -> channel broadcast

    def gn_prelu(h, p_ref):
        # p_ref rows: [linear bias, gn gamma, gn beta, prelu alpha]; all math in f32.
        b = p_ref[0:1, :]
        gamma = p_ref[1:2, :]
        beta = p_ref[2:3, :]
        alpha = p_ref[3:4, :]
        h = h + b                                                       # (TB, H) f32
        tb = h.shape[0]
        # One fused matmul pair for both statistics (mean and E[x^2]) via batch concat.
        hh = jnp.concatenate([h, h * h], axis=0)                        # (2*TB, H)
        stats_g = jnp.dot(hh, sel, preferred_element_type=jnp.float32)  # (2*TB, G)
        stats = jnp.dot(stats_g, bcast,
                        preferred_element_type=jnp.float32)             # (2*TB, H)
        mean = stats[:tb]
        var = jnp.maximum(stats[tb:] - mean * mean, 0.0)                # biased var (PyTorch GN)
        y = (h - mean) * lax.rsqrt(var + eps) * gamma + beta
        return jnp.where(y >= 0, y, alpha * y)                          # PReLU

    x = x_ref[...]                                                      # (TB, D)
    h1 = jnp.dot(x.astype(mxu_dt), w1_ref[...],
                 preferred_element_type=jnp.float32)                    # (TB, H) f32
    a1 = gn_prelu(h1, p1_ref)
    h2 = jnp.dot(a1.astype(mxu_dt), w2_ref[...],
                 preferred_element_type=jnp.float32)                    # (TB, H) f32
    a2 = gn_prelu(h2, p2_ref)
    out = jnp.dot(a2.astype(mxu_dt), w3_ref[...],
                  preferred_element_type=jnp.float32) + b3_ref[...]     # (TB, Ep) f32
    out_ref[...] = out.astype(out_ref.dtype)


def classifier_forward(x, params, *, tile_b=512, mxu_dtype=jnp.bfloat16):
    """Fused Classifier forward.

    params: w1,b1,g1,be1,a1,w2,b2,g2,be2,a2,w3,b3.
    Weights are (in, out); bias / gamma / beta / alpha are (1, C).
    mxu_dtype: dtype of the layer-weight matmul operands (bf16 recommended on v6e/v7x).
    """
    B, D = x.shape
    H = params["w1"].shape[1]
    E = params["w3"].shape[1]
    G = _GROUPS
    assert H % G == 0, "hidden_dim must be divisible by num_groups=4"
    S = H // G
    f32 = jnp.float32

    # ---- batch tiling: multiple of 8, big by default, >=2 grid steps when possible (v7x 2 TCs)
    Bp8 = _round_up(B, 8)
    tb = min(_round_up(tile_b, 8), Bp8)
    if Bp8 > 8 and Bp8 // tb < 2:
        tb = _round_up((Bp8 + 1) // 2, 8)
    Bp = _round_up(B, tb)
    xp = jnp.pad(x, ((0, Bp - B), (0, 0))) if Bp != B else x

    # ---- lane-dense output: pad E up to a multiple of 128, slice back afterwards
    Ep = _round_up(E, 128)

    # ---- weight / param prep (done once, outside the kernel)
    w1 = params["w1"].astype(mxu_dtype)
    w2 = params["w2"].astype(mxu_dtype)
    w3 = jnp.pad(params["w3"], ((0, 0), (0, Ep - E))).astype(mxu_dtype)
    b3 = jnp.pad(params["b3"].astype(f32), ((0, 0), (0, Ep - E)))

    # Pack per-layer vectors into one (4, H) slab each -> fewer input refs / DMAs.
    p1 = jnp.concatenate([params["b1"], params["g1"], params["be1"], params["a1"]],
                         axis=0).astype(f32)
    p2 = jnp.concatenate([params["b2"], params["g2"], params["be2"], params["a2"]],
                         axis=0).astype(f32)

    # GroupNorm statistic matrices (built once here, not per grid step in the kernel).
    ch = jnp.arange(H, dtype=jnp.int32) // S
    grp = jnp.arange(G, dtype=jnp.int32)
    sel = (ch[:, None] == grp[None, :]).astype(f32) * (1.0 / S)   # (H, G)
    bcast = (grp[:, None] == ch[None, :]).astype(f32)             # (G, H)

    # ---- explicit VMEM budget from the real footprint (double-buffered ins/outs + temps)
    w_item = jnp.dtype(mxu_dtype).itemsize
    weights_bytes = (D * H + H * H + H * Ep) * w_item
    small_bytes = (2 * 4 * H + Ep + 2 * H * G) * 4
    stream_bytes = tb * D * x.dtype.itemsize + tb * Ep * 4
    interm_bytes = (10 * tb * H + 2 * tb * Ep + tb * D) * 4
    footprint = 2 * (weights_bytes + small_bytes + stream_bytes) + interm_bytes
    vmem_limit = int(min(max(2 * footprint + (8 << 20), 16 << 20), 64 << 20))

    grid = (Bp // tb,)
    out = pl.pallas_call(
        classifier_kernel,
        out_shape=jax.ShapeDtypeStruct((Bp, Ep), jnp.float32),
        grid=grid,
        in_specs=[
            pl.BlockSpec((tb, D), lambda i: (i, 0)),     # x: streamed per batch tile
            pl.BlockSpec((D, H), lambda i: (0, 0)),      # w1: VMEM-resident
            pl.BlockSpec((4, H), lambda i: (0, 0)),      # packed layer-1 params
            pl.BlockSpec((H, H), lambda i: (0, 0)),      # w2
            pl.BlockSpec((4, H), lambda i: (0, 0)),      # packed layer-2 params
            pl.BlockSpec((H, Ep), lambda i: (0, 0)),     # w3 (lane-padded)
            pl.BlockSpec((1, Ep), lambda i: (0, 0)),     # b3 (lane-padded)
            pl.BlockSpec((H, G), lambda i: (0, 0)),      # GN group-mean selector
            pl.BlockSpec((G, H), lambda i: (0, 0)),      # GN broadcast-back
        ],
        out_specs=pl.BlockSpec((tb, Ep), lambda i: (i, 0)),
        compiler_params=pltpu.CompilerParams(
            dimension_semantics=("parallel",),
            vmem_limit_bytes=vmem_limit),
    )(xp, w1, p1, w2, p2, w3, b3, sel, bcast)

    return out[:B, :E]


def classifier_ref(x, p):
    """Plain-JAX f32 reference (GroupNorm with 4 groups, biased variance, eps=1e-5)."""
    eps = jnp.float32(1e-5)

    def gn_prelu(h, b, g, be, a, G=_GROUPS):
        h = h + b
        N, C = h.shape
        hr = h.reshape(N, G, C // G)
        mean = hr.mean(axis=-1, keepdims=True)
        var = ((hr - mean) ** 2).mean(axis=-1, keepdims=True)
        hn = ((hr - mean) * lax.rsqrt(var + eps)).reshape(N, C)
        y = hn * g + be
        return jnp.where(y >= 0, y, a * y)

    h = x @ p["w1"]
    h = gn_prelu(h, p["b1"], p["g1"], p["be1"], p["a1"])
    h = h @ p["w2"]
    h = gn_prelu(h, p["b2"], p["g2"], p["be2"], p["a2"])
    return h @ p["w3"] + p["b3"]


if __name__ == "__main__":
    B = 8
    in_dim = 64
    hidden_dim = 32   # divisible by num_groups = 4
    emb_dim = 16

    key = jax.random.PRNGKey(0)
    ks = jax.random.split(key, 12)

    x = jax.random.normal(ks[0], (B, in_dim), dtype=jnp.float32)

    def init_lin(kw, kb, fan_in, fan_out):
        bound = 1.0 / jnp.sqrt(fan_in)
        w = jax.random.uniform(kw, (fan_in, fan_out), jnp.float32, -bound, bound)
        b = jax.random.uniform(kb, (1, fan_out), jnp.float32, -bound, bound)
        return w, b

    w1, b1 = init_lin(ks[1], ks[2], in_dim, hidden_dim)
    w2, b2 = init_lin(ks[3], ks[4], hidden_dim, hidden_dim)
    w3, b3 = init_lin(ks[5], ks[6], hidden_dim, emb_dim)

    params = {
        "w1": w1, "b1": b1,
        "g1": 1.0 + 0.1 * jax.random.normal(ks[7], (1, hidden_dim), jnp.float32),
        "be1": 0.1 * jax.random.normal(ks[8], (1, hidden_dim), jnp.float32),
        "a1": jnp.full((1, hidden_dim), 0.25, jnp.float32),   # PReLU default alpha, broadcast
        "w2": w2, "b2": b2,
        "g2": 1.0 + 0.1 * jax.random.normal(ks[9], (1, hidden_dim), jnp.float32),
        "be2": 0.1 * jax.random.normal(ks[10], (1, hidden_dim), jnp.float32),
        "a2": jnp.full((1, hidden_dim), 0.25, jnp.float32),
        "w3": w3, "b3": b3,
    }

    ref = classifier_ref(x, params)

    # f32 MXU path: must match the PyTorch-f32 semantics tightly.
    out_f32 = jax.block_until_ready(classifier_forward(x, params, mxu_dtype=jnp.float32))
    assert out_f32.shape == (B, emb_dim), out_f32.shape
    assert jnp.allclose(out_f32, ref, rtol=1e-4, atol=1e-4), (out_f32, ref)

    # bf16 MXU path (v6e/v7x perf config): f32 accumulation + f32 GN math, looser tolerance.
    out_bf16 = jax.block_until_ready(classifier_forward(x, params, mxu_dtype=jnp.bfloat16))
    assert out_bf16.shape == (B, emb_dim), out_bf16.shape
    assert jnp.allclose(out_bf16, ref, rtol=5e-2, atol=5e-2), (out_bf16, ref)

    print("KERNEL_OK")
</pallas_src>

<mosaic_0001>
module attributes {stable_mosaic.version = 11 : i64} {
  func.func @classifier_kernel(%arg0: i32, %arg1: memref<8x64xf32, #tpu.memory_space<vmem>>, %arg2: memref<64x32xf32, #tpu.memory_space<vmem>>, %arg3: memref<4x32xf32, #tpu.memory_space<vmem>>, %arg4: memref<32x32xf32, #tpu.memory_space<vmem>>, %arg5: memref<4x32xf32, #tpu.memory_space<vmem>>, %arg6: memref<32x128xf32, #tpu.memory_space<vmem>>, %arg7: memref<1x128xf32, #tpu.memory_space<vmem>>, %arg8: memref<32x4xf32, #tpu.memory_space<vmem>>, %arg9: memref<4x32xf32, #tpu.memory_space<vmem>>, %arg10: memref<8x128xf32, #tpu.memory_space<vmem>>) attributes {dimension_semantics = [#tpu.dimension_semantics<parallel>], iteration_bounds = array<i64: 1>, scalar_prefetch = 0 : i64, scratch_operands = 0 : i64, tpu.core_type = #tpu.core_type<tc>, window_params = [{transform_indices = @transform_0, window_bounds = array<i64: 8, 64>}, {pipeline_mode = #tpu.pipeline_mode<synchronous>, transform_indices = @transform_1, window_bounds = array<i64: 64, 32>}, {pipeline_mode = #tpu.pipeline_mode<synchronous>, transform_indices = @transform_2, window_bounds = array<i64: 4, 32>}, {pipeline_mode = #tpu.pipeline_mode<synchronous>, transform_indices = @transform_3, window_bounds = array<i64: 32, 32>}, {pipeline_mode = #tpu.pipeline_mode<synchronous>, transform_indices = @transform_4, window_bounds = array<i64: 4, 32>}, {pipeline_mode = #tpu.pipeline_mode<synchronous>, transform_indices = @transform_5, window_bounds = array<i64: 32, 128>}, {pipeline_mode = #tpu.pipeline_mode<synchronous>, transform_indices = @transform_6, window_bounds = array<i64: 1, 128>}, {pipeline_mode = #tpu.pipeline_mode<synchronous>, transform_indices = @transform_7, window_bounds = array<i64: 32, 4>}, {pipeline_mode = #tpu.pipeline_mode<synchronous>, transform_indices = @transform_8, window_bounds = array<i64: 4, 32>}, {transform_indices = @transform_9, window_bounds = array<i64: 8, 128>}]} {
    %c0 = arith.constant 0 : index
    %c0_0 = arith.constant 0 : index
    %0 = vector.load %arg8[%c0, %c0_0] : memref<32x4xf32, #tpu.memory_space<vmem>>, vector<32x4xf32>
    %c0_1 = arith.constant 0 : index
    %c0_2 = arith.constant 0 : index
    %1 = vector.load %arg9[%c0_1, %c0_2] : memref<4x32xf32, #tpu.memory_space<vmem>>, vector<4x32xf32>
    %c0_3 = arith.constant 0 : index
    %c0_4 = arith.constant 0 : index
    %2 = vector.load %arg1[%c0_3, %c0_4] : memref<8x64xf32, #tpu.memory_space<vmem>>, vector<8x64xf32>
    %c0_5 = arith.constant 0 : index
    %c0_6 = arith.constant 0 : index
    %3 = vector.load %arg2[%c0_5, %c0_6] : memref<64x32xf32, #tpu.memory_space<vmem>>, vector<64x32xf32>
    %cst = arith.constant dense<0.000000e+00> : vector<8x32xf32>
    %4 = tpu.matmul %2, %3, %cst {dimension_numbers = #tpu.dot_dimension_numbers<[1], [0], [0], [1], [0, 0, 1, 1], [], []>} : vector<8x64xf32>, vector<64x32xf32>, vector<8x32xf32> -> vector<8x32xf32>
    %c0_7 = arith.constant 0 : index
    %c0_8 = arith.constant 0 : index
    %5 = vector.load %arg3[%c0_7, %c0_8] : memref<4x32xf32, #tpu.memory_space<vmem>>, vector<1x32xf32>
    %c1 = arith.constant 1 : index
    %c0_9 = arith.constant 0 : index
    %6 = vector.load %arg3[%c1, %c0_9] : memref<4x32xf32, #tpu.memory_space<vmem>>, vector<1x32xf32>
    %c2 = arith.constant 2 : index
    %c0_10 = arith.constant 0 : index
    %7 = vector.load %arg3[%c2, %c0_10] : memref<4x32xf32, #tpu.memory_space<vmem>>, vector<1x32xf32>
    %c3 = arith.constant 3 : index
    %c0_11 = arith.constant 0 : index
    %8 = vector.load %arg3[%c3, %c0_11] : memref<4x32xf32, #tpu.memory_space<vmem>>, vector<1x32xf32>
    %9 = vector.broadcast %5 : vector<1x32xf32> to vector<8x32xf32>
    %10 = arith.addf %4, %9 : vector<8x32xf32>
    %11 = arith.mulf %10, %10 : vector<8x32xf32>
    %12 = tpu.concatenate %10, %11 in 0 : vector<8x32xf32>, vector<8x32xf32> -> vector<16x32xf32>
    %cst_12 = arith.constant dense<0.000000e+00> : vector<16x4xf32>
    %13 = tpu.matmul %12, %0, %cst_12 {dimension_numbers = #tpu.dot_dimension_numbers<[1], [0], [0], [1], [0, 0, 1, 1], [], []>} : vector<16x32xf32>, vector<32x4xf32>, vector<16x4xf32> -> vector<16x4xf32>
    %cst_13 = arith.constant dense<0.000000e+00> : vector<16x32xf32>
    %14 = tpu.matmul %13, %1, %cst_13 {dimension_numbers = #tpu.dot_dimension_numbers<[1], [0], [0], [1], [0, 0, 1, 1], [], []>} : vector<16x4xf32>, vector<4x32xf32>, vector<16x32xf32> -> vector<16x32xf32>
    %15 = vector.extract_strided_slice %14 {offsets = [0, 0], sizes = [8, 32], strides = [1, 1]} : vector<16x32xf32> to vector<8x32xf32>
    %16 = vector.extract_strided_slice %14 {offsets = [8, 0], sizes = [8, 32], strides = [1, 1]} : vector<16x32xf32> to vector<8x32xf32>
    %17 = arith.mulf %15, %15 : vector<8x32xf32>
    %18 = arith.subf %16, %17 : vector<8x32xf32>
    %cst_14 = arith.constant 0.000000e+00 : f32
    %19 = vector.broadcast %cst_14 : f32 to vector<8x32xf32>
    %20 = arith.maximumf %18, %19 : vector<8x32xf32>
    %21 = arith.subf %10, %15 : vector<8x32xf32>
    %cst_15 = arith.constant 9.99999974E-6 : f32
    %22 = vector.broadcast %cst_15 : f32 to vector<8x32xf32>
    %23 = arith.addf %20, %22 : vector<8x32xf32>
    %24 = math.rsqrt %23 : vector<8x32xf32>
    %25 = arith.mulf %21, %24 : vector<8x32xf32>
    %26 = vector.broadcast %6 : vector<1x32xf32> to vector<8x32xf32>
    %27 = arith.mulf %25, %26 : vector<8x32xf32>
    %28 = vector.broadcast %7 : vector<1x32xf32> to vector<8x32xf32>
    %29 = arith.addf %27, %28 : vector<8x32xf32>
    %cst_16 = arith.constant 0.000000e+00 : f32
    %30 = vector.broadcast %cst_16 : f32 to vector<8x32xf32>
    %31 = arith.cmpf oge, %29, %30 : vector<8x32xf32>
    %32 = vector.broadcast %8 : vector<1x32xf32> to vector<8x32xf32>
    %33 = arith.mulf %32, %29 : vector<8x32xf32>
    %34 = arith.select %31, %29, %33 : vector<8x32xi1>, vector<8x32xf32>
    %c0_17 = arith.constant 0 : index
    %c0_18 = arith.constant 0 : index
    %35 = vector.load %arg4[%c0_17, %c0_18] : memref<32x32xf32, #tpu.memory_space<vmem>>, vector<32x32xf32>
    %cst_19 = arith.constant dense<0.000000e+00> : vector<8x32xf32>
    %36 = tpu.matmul %34, %35, %cst_19 {dimension_numbers = #tpu.dot_dimension_numbers<[1], [0], [0], [1], [0, 0, 1, 1], [], []>} : vector<8x32xf32>, vector<32x32xf32>, vector<8x32xf32> -> vector<8x32xf32>
    %c0_20 = arith.constant 0 : index
    %c0_21 = arith.constant 0 : index
    %37 = vector.load %arg5[%c0_20, %c0_21] : memref<4x32xf32, #tpu.memory_space<vmem>>, vector<1x32xf32>
    %c1_22 = arith.constant 1 : index
    %c0_23 = arith.constant 0 : index
    %38 = vector.load %arg5[%c1_22, %c0_23] : memref<4x32xf32, #tpu.memory_space<vmem>>, vector<1x32xf32>
    %c2_24 = arith.constant 2 : index
    %c0_25 = arith.constant 0 : index
    %39 = vector.load %arg5[%c2_24, %c0_25] : memref<4x32xf32, #tpu.memory_space<vmem>>, vector<1x32xf32>
    %c3_26 = arith.constant 3 : index
    %c0_27 = arith.constant 0 : index
    %40 = vector.load %arg5[%c3_26, %c0_27] : memref<4x32xf32, #tpu.memory_space<vmem>>, vector<1x32xf32>
    %41 = vector.broadcast %37 : vector<1x32xf32> to vector<8x32xf32>
    %42 = arith.addf %36, %41 : vector<8x32xf32>
    %43 = arith.mulf %42, %42 : vector<8x32xf32>
    %44 = tpu.concatenate %42, %43 in 0 : vector<8x32xf32>, vector<8x32xf32> -> vector<16x32xf32>
    %cst_28 = arith.constant dense<0.000000e+00> : vector<16x4xf32>
    %45 = tpu.matmul %44, %0, %cst_28 {dimension_numbers = #tpu.dot_dimension_numbers<[1], [0], [0], [1], [0, 0, 1, 1], [], []>} : vector<16x32xf32>, vector<32x4xf32>, vector<16x4xf32> -> vector<16x4xf32>
    %cst_29 = arith.constant dense<0.000000e+00> : vector<16x32xf32>
    %46 = tpu.matmul %45, %1, %cst_29 {dimension_numbers = #tpu.dot_dimension_numbers<[1], [0], [0], [1], [0, 0, 1, 1], [], []>} : vector<16x4xf32>, vector<4x32xf32>, vector<16x32xf32> -> vector<16x32xf32>
    %47 = vector.extract_strided_slice %46 {offsets = [0, 0], sizes = [8, 32], strides = [1, 1]} : vector<16x32xf32> to vector<8x32xf32>
    %48 = vector.extract_strided_slice %46 {offsets = [8, 0], sizes = [8, 32], strides = [1, 1]} : vector<16x32xf32> to vector<8x32xf32>
    %49 = arith.mulf %47, %47 : vector<8x32xf32>
    %50 = arith.subf %48, %49 : vector<8x32xf32>
    %cst_30 = arith.constant 0.000000e+00 : f32
    %51 = vector.broadcast %cst_30 : f32 to vector<8x32xf32>
    %52 = arith.maximumf %50, %51 : vector<8x32xf32>
    %53 = arith.subf %42, %47 : vector<8x32xf32>
    %cst_31 = arith.constant 9.99999974E-6 : f32
    %54 = vector.broadcast %cst_31 : f32 to vector<8x32xf32>
    %55 = arith.addf %52, %54 : vector<8x32xf32>
    %56 = math.rsqrt %55 : vector<8x32xf32>
    %57 = arith.mulf %53, %56 : vector<8x32xf32>
    %58 = vector.broadcast %38 : vector<1x32xf32> to vector<8x32xf32>
    %59 = arith.mulf %57, %58 : vector<8x32xf32>
    %60 = vector.broadcast %39 : vector<1x32xf32> to vector<8x32xf32>
    %61 = arith.addf %59, %60 : vector<8x32xf32>
    %cst_32 = arith.constant 0.000000e+00 : f32
    %62 = vector.broadcast %cst_32 : f32 to vector<8x32xf32>
    %63 = arith.cmpf oge, %61, %62 : vector<8x32xf32>
    %64 = vector.broadcast %40 : vector<1x32xf32> to vector<8x32xf32>
    %65 = arith.mulf %64, %61 : vector<8x32xf32>
    %66 = arith.select %63, %61, %65 : vector<8x32xi1>, vector<8x32xf32>
    %c0_33 = arith.constant 0 : index
    %c0_34 = arith.constant 0 : index
    %67 = vector.load %arg6[%c0_33, %c0_34] : memref<32x128xf32, #tpu.memory_space<vmem>>, vector<32x128xf32>
    %cst_35 = arith.constant dense<0.000000e+00> : vector<8x128xf32>
    %68 = tpu.matmul %66, %67, %cst_35 {dimension_numbers = #tpu.dot_dimension_numbers<[1], [0], [0], [1], [0, 0, 1, 1], [], []>} : vector<8x32xf32>, vector<32x128xf32>, vector<8x128xf32> -> vector<8x128xf32>
    %c0_36 = arith.constant 0 : index
    %c0_37 = arith.constant 0 : index
    %69 = vector.load %arg7[%c0_36, %c0_37] : memref<1x128xf32, #tpu.memory_space<vmem>>, vector<1x128xf32>
    %70 = vector.broadcast %69 : vector<1x128xf32> to vector<8x128xf32>
    %71 = arith.addf %68, %70 : vector<8x128xf32>
    %c0_38 = arith.constant 0 : index
    %c0_39 = arith.constant 0 : index
    %72 = vector.load %arg10[%c0_38, %c0_39] : memref<8x128xf32, #tpu.memory_space<vmem>>, vector<8x128xf32>
    tpu.vector_store %arg10[%c0_38, %c0_39], %71 {strides = array<i32>} : memref<8x128xf32, #tpu.memory_space<vmem>>, vector<8x128xf32>,
    return
  }
  func.func @transform_0(%arg0: i32) -> (i32, i32) {
    %c0_i32 = arith.constant 0 : i32
    %c0_i32_0 = arith.constant 0 : i32
    return %arg0, %c0_i32 : i32, i32
  }
  func.func @transform_1(%arg0: i32) -> (i32, i32) {
    %c0_i32 = arith.constant 0 : i32
    %c0_i32_0 = arith.constant 0 : i32
    %c0_i32_1 = arith.constant 0 : i32
    return %c0_i32, %c0_i32_0 : i32, i32
  }
  func.func @transform_2(%arg0: i32) -> (i32, i32) {
    %c0_i32 = arith.constant 0 : i32
    %c0_i32_0 = arith.constant 0 : i32
    %c0_i32_1 = arith.constant 0 : i32
    return %c0_i32, %c0_i32_0 : i32, i32
  }
  func.func @transform_3(%arg0: i32) -> (i32, i32) {
    %c0_i32 = arith.constant 0 : i32
    %c0_i32_0 = arith.constant 0 : i32
    %c0_i32_1 = arith.constant 0 : i32
    return %c0_i32, %c0_i32_0 : i32, i32
  }
  func.func @transform_4(%arg0: i32) -> (i32, i32) {
    %c0_i32 = arith.constant 0 : i32
    %c0_i32_0 = arith.constant 0 : i32
    %c0_i32_1 = arith.constant 0 : i32
    return %c0_i32, %c0_i32_0 : i32, i32
  }
  func.func @transform_5(%arg0: i32) -> (i32, i32) {
    %c0_i32 = arith.constant 0 : i32
    %c0_i32_0 = arith.constant 0 : i32
    %c0_i32_1 = arith.constant 0 : i32
    return %c0_i32, %c0_i32_0 : i32, i32
  }
  func.func @transform_6(%arg0: i32) -> (i32, i32) {
    %c0_i32 = arith.constant 0 : i32
    %c0_i32_0 = arith.constant 0 : i32
    %c0_i32_1 = arith.constant 0 : i32
    return %c0_i32, %c0_i32_0 : i32, i32
  }
  func.func @transform_7(%arg0: i32) -> (i32, i32) {
    %c0_i32 = arith.constant 0 : i32
    %c0_i32_0 = arith.constant 0 : i32
    %c0_i32_1 = arith.constant 0 : i32
    return %c0_i32, %c0_i32_0 : i32, i32
  }
  func.func @transform_8(%arg0: i32) -> (i32, i32) {
    %c0_i32 = arith.constant 0 : i32
    %c0_i32_0 = arith.constant 0 : i32
    %c0_i32_1 = arith.constant 0 : i32
    return %c0_i32, %c0_i32_0 : i32, i32
  }
  func.func @transform_9(%arg0: i32) -> (i32, i32) {
    %c0_i32 = arith.constant 0 : i32
    %c0_i32_0 = arith.constant 0 : i32
    return %arg0, %c0_i32 : i32, i32
  }
}

</mosaic_0001>

<llo_original>
// kernel: tpu_custom_call.1
$region0: #{tpu_custom_call.1}
  #allocation0 [shape = 'u32[]', space=smem, size = 0x4, offset = 0x4, fixed_abs, tag = 'smem constant byte address 0x4 - core index']
  #allocation1 [shape = 'u32[144,128]{1,0:T(1,128)}', space=vmem, size = 0x12000, scoped, tag = 'internal scratch']
  %s0 = inlined_call_operand.vmem [shape: f32[8,64], index: 0, kind: input, shape index: {}]
  %s1 = inlined_call_operand.vmem [shape: f32[64,32], index: 1, kind: input, shape index: {}]
  %s2 = inlined_call_operand.vmem [shape: f32[4,32], index: 2, kind: input, shape index: {}]
  %s3 = inlined_call_operand.vmem [shape: f32[32,32], index: 3, kind: input, shape index: {}]
  %s4 = inlined_call_operand.vmem [shape: f32[4,32], index: 4, kind: input, shape index: {}]
  %s5 = inlined_call_operand.vmem [shape: f32[32,128], index: 5, kind: input, shape index: {}]
  %s6 = inlined_call_operand.vmem [shape: f32[1,128], index: 6, kind: input, shape index: {}]
  %s7 = inlined_call_operand.vmem [shape: f32[32,4], index: 7, kind: input, shape index: {}]
  %s8 = inlined_call_operand.vmem [shape: f32[4,32], index: 8, kind: input, shape index: {}]
  %s9 = inlined_call_operand.hbm [shape: f32[8,128], index: 9, kind: output, shape index: {}]
  %s10 = sld [smem:[#allocation0]]
  $region46: #{tpu_custom_call.1} parent=0
    _
  %s12 = ssub.s32 1, %s10
  %s13 = scalar_select 0, %s12, %s10
  $region1: #{tpu_custom_call.1} parent=0
    #allocation2 [shape = 'u8[4096]{0}', space=vmem, size = 0x1000, scoped, tag = 'output window, operand 0, single buffered']
    #allocation3 [shape = 's32[1]{0}', space=sflag, size = 0x4, scoped, tag = 'scoped memory for tpu_custom_call.1']
    %14 = vsyncpa [#allocation3], 0
    // Predicated region
    $region2: #{tpu_custom_call.1} parent=1 // pred_check
      _
    $region3: #{tpu_custom_call.1} parent=1 // pred_check_branch
      %16 = sbr.rel (0) target = $region5
    $region4: #{tpu_custom_call.1} parent=1 // pred_region
      _
    $region5: #{tpu_custom_call.1} parent=1 // pred_fallthru
      _
    // Predicated region
    $region6: #{tpu_custom_call.1} parent=1 // pred_check
      _
    $region7: #{tpu_custom_call.1} parent=1 // pred_check_branch
      %18 = sbr.rel (0) target = $region9
    $region8: #{tpu_custom_call.1} parent=1 // pred_region
      _
    $region9: #{tpu_custom_call.1} parent=1 // pred_fallthru
      _
    // Predicated region
    $region10: #{tpu_custom_call.1} parent=1 // pred_check
      _
    $region11: #{tpu_custom_call.1} parent=1 // pred_check_branch
      %20 = sbr.rel (0) target = $region13
    $region12: #{tpu_custom_call.1} parent=1 // pred_region
      _
    $region13: #{tpu_custom_call.1} parent=1 // pred_fallthru
      _
    // Predicated region
    $region14: #{tpu_custom_call.1} parent=1 // pred_check
      _
    $region15: #{tpu_custom_call.1} parent=1 // pred_check_branch
      %22 = sbr.rel (0) target = $region17
    $region16: #{tpu_custom_call.1} parent=1 // pred_region
      _
    $region17: #{tpu_custom_call.1} parent=1 // pred_fallthru
      _
    // Predicated region
    $region18: #{tpu_custom_call.1} parent=1 // pred_check
      _
    $region19: #{tpu_custom_call.1} parent=1 // pred_check_branch
      %24 = sbr.rel (0) target = $region21
    $region20: #{tpu_custom_call.1} parent=1 // pred_region
      _
    $region21: #{tpu_custom_call.1} parent=1 // pred_fallthru
      _
    // Predicated region
    $region22: #{tpu_custom_call.1} parent=1 // pred_check
      _
    $region23: #{tpu_custom_call.1} parent=1 // pred_check_branch
      %26 = sbr.rel (0) target = $region25
    $region24: #{tpu_custom_call.1} parent=1 // pred_region
      _
    $region25: #{tpu_custom_call.1} parent=1 // pred_fallthru
      _
    // Predicated region
    $region26: #{tpu_custom_call.1} parent=1 // pred_check
      _
    $region27: #{tpu_custom_call.1} parent=1 // pred_check_branch
      %28 = sbr.rel (0) target = $region29
    $region28: #{tpu_custom_call.1} parent=1 // pred_region
      _
    $region29: #{tpu_custom_call.1} parent=1 // pred_fallthru
      _
    // Predicated region
    $region30: #{tpu_custom_call.1} parent=1 // pred_check
      _
    $region31: #{tpu_custom_call.1} parent=1 // pred_check_branch
      %30 = sbr.rel (0) target = $region33
    $region32: #{tpu_custom_call.1} parent=1 // pred_region
      _
    $region33: #{tpu_custom_call.1} parent=1 // pred_fallthru
      _
    // Predicated region
    $region34: #{tpu_custom_call.1} parent=1 // pred_check
      _
    $region35: #{tpu_custom_call.1} parent=1 // pred_check_branch
      %32 = sbr.rel (0) target = $region37
    $region36: #{tpu_custom_call.1} parent=1 // pred_region
      _
    $region37: #{tpu_custom_call.1} parent=1 // pred_fallthru
      _
    %v33 = vld [vmem:[%s7] sm:$0xff]
    %v34 = vld [vmem:[%s7 + $0x8] sm:$0xff]
    %v35 = vld [vmem:[%s7 + $0x10] sm:$0xff]
    %v36 = vld [vmem:[%s7 + $0x18] sm:$0xff]
    %v37 = vld [vmem:[%s8] sm:$0xf]
    %v38 = vld [vmem:[%s0] sm:$0xff]
    %v39 = vld [vmem:[%s1] sm:$0xff]
    %v40 = vld [vmem:[%s1 + $0x8] sm:$0xff]
    %v41 = vld [vmem:[%s1 + $0x10] sm:$0xff]
    %v42 = vld [vmem:[%s1 + $0x18] sm:$0xff]
    %v43 = vld [vmem:[%s1 + $0x20] sm:$0xff]
    %v44 = vld [vmem:[%s1 + $0x28] sm:$0xff]
    %v45 = vld [vmem:[%s1 + $0x30] sm:$0xff]
    %v46 = vld [vmem:[%s1 + $0x38] sm:$0xff]
    %v47 = vld [vmem:[%s2] sm:$0x1]
    %v48 = vld [vmem:[%s2 + $0x1] sm:$0x1]
    %v49 = vld [vmem:[%s2 + $0x2] sm:$0x1]
    %v50 = vld [vmem:[%s2 + $0x3] sm:$0x1]
    %v51 = vlaneseq
    %v52 = vshrl.u32 %v51, 7
    %v53 = vsub.s32 0, %v52
    %v54 = vrot.slane %v47, %v53
    %vm55 = vcmask 523264
    %v57 = vsel %vm55, %v38, 0
    %59 = vmatprep.subr.mxu0 0.0
    %60 = vmatpush1.msra.mxu0 0.0
    %61 = vmatprep.subr.mxu0 0.0
    %62 = vmatpush1.msra.mxu0 0.0
    %63 = vmatprep.subr.mxu0 0.0
    %64 = vmatpush1.msra.mxu0 0.0
    %65 = vmatprep.subr.mxu0 0.0
    %66 = vmatpush1.msra.mxu0 0.0
    %67 = vmatprep.subr.mxu0 0.0
    %68 = vmatpush1.msra.mxu0 0.0
    %69 = vmatprep.subr.mxu0 0.0
    %70 = vmatpush1.msra.mxu0 0.0
    %71 = vmatprep.subr.mxu0 0.0
    %72 = vmatpush1.msra.mxu0 0.0
    %73 = vmatprep.subr.mxu0 0.0
    %74 = vmatpush1.msra.mxu0 0.0
    %75 = vmatprep.subr.mxu0 0.0
    %76 = vmatpush1.msra.mxu0 %v46
    %77 = vmatprep.subr.mxu0 0.0
    %78 = vmatpush1.msra.mxu0 %v45
    %79 = vmatprep.subr.mxu0 0.0
    %80 = vmatpush1.msra.mxu0 %v44
    %81 = vmatprep.subr.mxu0 0.0
    %82 = vmatpush1.msra.mxu0 %v43
    %83 = vmatprep.subr.mxu0 0.0
    %84 = vmatpush1.msra.mxu0 %v42
    %85 = vmatprep.subr.mxu0 0.0
    %86 = vmatpush1.msra.mxu0 %v41
    %87 = vmatprep.subr.mxu0 0.0
    %88 = vmatpush1.msra.mxu0 %v40
    %89 = vmatprep.subr.mxu0 0.0
    %90 = vmatpush1.msra.mxu0 %v39
    %91 = vmatprep.subr.mxu0 0.0
    %92 = vmatpush2.msra.mxu0 0.0
    %93 = vmatprep.subr.mxu0 0.0
    %94 = vmatpush2.msra.mxu0 0.0
    %95 = vmatprep.subr.mxu0 0.0
    %96 = vmatpush2.msra.mxu0 0.0
    %97 = vmatprep.subr.mxu0 0.0
    %98 = vmatpush2.msra.mxu0 0.0
    %99 = vmatprep.subr.mxu0 0.0
    %100 = vmatpush2.msra.mxu0 0.0
    %101 = vmatprep.subr.mxu0 0.0
    %102 = vmatpush2.msra.mxu0 0.0
    %103 = vmatprep.subr.mxu0 0.0
    %104 = vmatpush2.msra.mxu0 0.0
    %105 = vmatprep.subr.mxu0 0.0
    %106 = vmatpush2.msra.mxu0 0.0
    %107 = vmatprep.subr.mxu0 0.0
    %108 = vmatpush2.msra.mxu0 0.0
    %109 = vmatprep.subr.mxu0 0.0
    %110 = vmatpush2.msra.mxu0 0.0
    %111 = vmatprep.subr.mxu0 0.0
    %112 = vmatpush2.msra.mxu0 0.0
    %113 = vmatprep.subr.mxu0 0.0
    %114 = vmatpush2.msra.mxu0 0.0
    %115 = vmatprep.subr.mxu0 0.0
    %116 = vmatpush2.msra.mxu0 0.0
    %117 = vmatprep.subr.mxu0 0.0
    %118 = vmatpush2.msra.mxu0 0.0
    %119 = vmatprep.subr.mxu0 0.0
    %120 = vmatpush2.msra.mxu0 0.0
    %121 = vmatprep.subr.mxu0 0.0
    %122 = vmatpush2.msra.mxu0 0.0
    %123 = vmatprep.mubr.f32.mxu0 0.0
    %124 = vmatmul.mubr.f32.gmra.mxu0 %v57
    %v125 = vpop.f32.mrf.mxu0
    %v126 = vadd.f32 %v54, %v125
    %v127 = vpop.f32.mrf.mxu0
    %128 = vdwg.mxu0
    %v129 = vmul.f32 %v126, %v126
    %vm130 = vcmask 261120
    %v132 = vsel %vm130, %v126, 0
    %v135 = vsel %vm130, %v129, 0
    %137 = vmatprep.subr.mxu0 0.0
    %138 = vmatpush1.msra.mxu0 0.0
    %139 = vmatprep.subr.mxu0 0.0
    %140 = vmatpush1.msra.mxu0 0.0
    %141 = vmatprep.subr.mxu0 0.0
    %142 = vmatpush1.msra.mxu0 0.0
    %143 = vmatprep.subr.mxu0 0.0
    %144 = vmatpush1.msra.mxu0 0.0
    %145 = vmatprep.subr.mxu0 0.0
    %146 = vmatpush1.msra.mxu0 0.0
    %147 = vmatprep.subr.mxu0 0.0
    %148 = vmatpush1.msra.mxu0 0.0
    %149 = vmatprep.subr.mxu0 0.0
    %150 = vmatpush1.msra.mxu0 0.0
    %151 = vmatprep.subr.mxu0 0.0
    %152 = vmatpush1.msra.mxu0 0.0
    %153 = vmatprep.subr.mxu0 0.0
    %154 = vmatpush1.msra.mxu0 0.0
    %155 = vmatprep.subr.mxu0 0.0
    %156 = vmatpush1.msra.mxu0 0.0
    %157 = vmatprep.subr.mxu0 0.0
    %158 = vmatpush1.msra.mxu0 0.0
    %159 = vmatprep.subr.mxu0 0.0
    %160 = vmatpush1.msra.mxu0 0.0
    %161 = vmatprep.subr.mxu0 0.0
    %162 = vmatpush1.msra.mxu0 %v36
    %163 = vmatprep.subr.mxu0 0.0
    %164 = vmatpush1.msra.mxu0 %v35
    %165 = vmatprep.subr.mxu0 0.0
    %166 = vmatpush1.msra.mxu0 %v34
    %167 = vmatprep.subr.mxu0 0.0
    %168 = vmatpush1.msra.mxu0 %v33
    %169 = vmatprep.subr.mxu0 0.0
    %170 = vmatpush2.msra.mxu0 0.0
    %171 = vmatprep.subr.mxu0 0.0
    %172 = vmatpush2.msra.mxu0 0.0
    %173 = vmatprep.subr.mxu0 0.0
    %174 = vmatpush2.msra.mxu0 0.0
    %175 = vmatprep.subr.mxu0 0.0
    %176 = vmatpush2.msra.mxu0 0.0
    %177 = vmatprep.subr.mxu0 0.0
    %178 = vmatpush2.msra.mxu0 0.0
    %179 = vmatprep.subr.mxu0 0.0
    %180 = vmatpush2.msra.mxu0 0.0
    %181 = vmatprep.subr.mxu0 0.0
    %182 = vmatpush2.msra.mxu0 0.0
    %183 = vmatprep.subr.mxu0 0.0
    %184 = vmatpush2.msra.mxu0 0.0
    %185 = vmatprep.subr.mxu0 0.0
    %186 = vmatpush2.msra.mxu0 0.0
    %187 = vmatprep.subr.mxu0 0.0
    %188 = vmatpush2.msra.mxu0 0.0
    %189 = vmatprep.subr.mxu0 0.0
    %190 = vmatpush2.msra.mxu0 0.0
    %191 = vmatprep.subr.mxu0 0.0
    %192 = vmatpush2.msra.mxu0 0.0
    %193 = vmatprep.subr.mxu0 0.0
    %194 = vmatpush2.msra.mxu0 0.0
    %195 = vmatprep.subr.mxu0 0.0
    %196 = vmatpush2.msra.mxu0 0.0
    %197 = vmatprep.subr.mxu0 0.0
    %198 = vmatpush2.msra.mxu0 0.0
    %199 = vmatprep.subr.mxu0 0.0
    %200 = vmatpush2.msra.mxu0 0.0
    %201 = vmatprep.mubr.f32.mxu0 0.0
    %202 = vmatmul.mubr.f32.gmra.mxu0 %v132
    %v203 = vpop.f32.mrf.mxu0
    %v204 = vadd.f32 0.0, %v203
    %v205 = vpop.f32.mrf.mxu0
    %206 = vmatprep.mubr.f32.mxu0 0.0
    %207 = vmatmul.mubr.f32.gmra.mxu0 %v135
    %v208 = vpop.f32.mrf.mxu0
    %v209 = vadd.f32 0.0, %v208
    %v210 = vpop.f32.mrf.mxu0
    %211 = vdwg.mxu0
    %vm212 = vcmask 31744
    %v214 = vsel %vm212, %v204, 0
    %v217 = vsel %vm212, %v209, 0
    %vm219 = vcmask 1043456
    %v221 = vsel %vm219, %v37, 0
    %223 = vmatprep.subr.mxu0 0.0
    %224 = vmatpush1.msra.mxu0 0.0
    %225 = vmatprep.subr.mxu0 0.0
    %226 = vmatpush1.msra.mxu0 0.0
    %227 = vmatprep.subr.mxu0 0.0
    %228 = vmatpush1.msra.mxu0 0.0
    %229 = vmatprep.subr.mxu0 0.0
    %230 = vmatpush1.msra.mxu0 0.0
    %231 = vmatprep.subr.mxu0 0.0
    %232 = vmatpush1.msra.mxu0 0.0
    %233 = vmatprep.subr.mxu0 0.0
    %234 = vmatpush1.msra.mxu0 0.0
    %235 = vmatprep.subr.mxu0 0.0
    %236 = vmatpush1.msra.mxu0 0.0
    %237 = vmatprep.subr.mxu0 0.0
    %238 = vmatpush1.msra.mxu0 0.0
    %239 = vmatprep.subr.mxu0 0.0
    %240 = vmatpush1.msra.mxu0 0.0
    %241 = vmatprep.subr.mxu0 0.0
    %242 = vmatpush1.msra.mxu0 0.0
    %243 = vmatprep.subr.mxu0 0.0
    %244 = vmatpush1.msra.mxu0 0.0
    %245 = vmatprep.subr.mxu0 0.0
    %246 = vmatpush1.msra.mxu0 0.0
    %247 = vmatprep.subr.mxu0 0.0
    %248 = vmatpush1.msra.mxu0 0.0
    %249 = vmatprep.subr.mxu0 0.0
    %250 = vmatpush1.msra.mxu0 0.0
    %251 = vmatprep.subr.mxu0 0.0
    %252 = vmatpush1.msra.mxu0 0.0
    %253 = vmatprep.subr.mxu0 0.0
    %254 = vmatpush1.msra.mxu0 %v221
    %255 = vmatprep.subr.mxu0 0.0
    %256 = vmatpush2.msra.mxu0 0.0
    %257 = vmatprep.subr.mxu0 0.0
    %258 = vmatpush2.msra.mxu0 0.0
    %259 = vmatprep.subr.mxu0 0.0
    %260 = vmatpush2.msra.mxu0 0.0
    %261 = vmatprep.subr.mxu0 0.0
    %262 = vmatpush2.msra.mxu0 0.0
    %263 = vmatprep.subr.mxu0 0.0
    %264 = vmatpush2.msra.mxu0 0.0
    %265 = vmatprep.subr.mxu0 0.0
    %266 = vmatpush2.msra.mxu0 0.0
    %267 = vmatprep.subr.mxu0 0.0
    %268 = vmatpush2.msra.mxu0 0.0
    %269 = vmatprep.subr.mxu0 0.0
    %270 = vmatpush2.msra.mxu0 0.0
    %271 = vmatprep.subr.mxu0 0.0
    %272 = vmatpush2.msra.mxu0 0.0
    %273 = vmatprep.subr.mxu0 0.0
    %274 = vmatpush2.msra.mxu0 0.0
    %275 = vmatprep.subr.mxu0 0.0
    %276 = vmatpush2.msra.mxu0 0.0
    %277 = vmatprep.subr.mxu0 0.0
    %278 = vmatpush2.msra.mxu0 0.0
    %279 = vmatprep.subr.mxu0 0.0
    %280 = vmatpush2.msra.mxu0 0.0
    %281 = vmatprep.subr.mxu0 0.0
    %282 = vmatpush2.msra.mxu0 0.0
    %283 = vmatprep.subr.mxu0 0.0
    %284 = vmatpush2.msra.mxu0 0.0
    %285 = vmatprep.subr.mxu0 0.0
    %286 = vmatpush2.msra.mxu0 0.0
    %287 = vmatprep.mubr.f32.mxu0 0.0
    %288 = vmatmul.mubr.f32.gmra.mxu0 %v214
    %v289 = vpop.f32.mrf.mxu0
    %v290 = vadd.f32 0.0, %v289
    %v291 = vpop.f32.mrf.mxu0
    %292 = vmatprep.mubr.f32.mxu0 0.0
    %293 = vmatmul.mubr.f32.gmra.mxu0 %v217
    %v294 = vpop.f32.mrf.mxu0
    %v295 = vadd.f32 0.0, %v294
    %v296 = vpop.f32.mrf.mxu0
    %297 = vdwg.mxu0
    %v298 = vmul.f32 %v290, %v290
    %v299 = vsub.f32 %v295, %v298
    %v300 = vmax.f32 %v299, 0.0
    %v301 = vsub.f32 %v126, %v290
    %v302 = vadd.f32 %v300, 1e-05
    %v303 = vrsqrt.pop %v302
    %v304 = vmul.f32 %v301, %v303
    %v305 = vlaneseq
    %v306 = vshrl.u32 %v305, 7
    %v307 = vsub.s32 0, %v306
    %v308 = vrot.slane %v48, %v307
    %v309 = vmul.f32 %v304, %v308
    %v310 = vlaneseq
    %v311 = vshrl.u32 %v310, 7
    %v312 = vsub.s32 0, %v311
    %v313 = vrot.slane %v49, %v312
    %v314 = vadd.f32 %v309, %v313
    %vm315 = vcmp.ge.f32.partialorder %v314, 0.0
    %v316 = vlaneseq
    %v317 = vshrl.u32 %v316, 7
    %v318 = vsub.s32 0, %v317
    %v319 = vrot.slane %v50, %v318
    %v320 = vmul.f32 %v319, %v314
    %v321 = vsel %vm315, %v314, %v320
    %v322 = vld [vmem:[%s3] sm:$0xff]
    %v323 = vld [vmem:[%s3 + $0x8] sm:$0xff]
    %v324 = vld [vmem:[%s3 + $0x10] sm:$0xff]
    %v325 = vld [vmem:[%s3 + $0x18] sm:$0xff]
    %v326 = vld [vmem:[%s4] sm:$0x1]
    %v327 = vld [vmem:[%s4 + $0x1] sm:$0x1]
    %v328 = vld [vmem:[%s4 + $0x2] sm:$0x1]
    %v329 = vld [vmem:[%s4 + $0x3] sm:$0x1]
    %v330 = vlaneseq
    %v331 = vshrl.u32 %v330, 7
    %v332 = vsub.s32 0, %v331
    %v333 = vrot.slane %v326, %v332
    %v335 = vsel %vm130, %v321, 0
    %337 = vmatprep.subr.mxu0 0.0
    %338 = vmatpush1.msra.mxu0 0.0
    %339 = vmatprep.subr.mxu0 0.0
    %340 = vmatpush1.msra.mxu0 0.0
    %341 = vmatprep.subr.mxu0 0.0
    %342 = vmatpush1.msra.mxu0 0.0
    %343 = vmatprep.subr.mxu0 0.0
    %344 = vmatpush1.msra.mxu0 0.0
    %345 = vmatprep.subr.mxu0 0.0
    %346 = vmatpush1.msra.mxu0 0.0
    %347 = vmatprep.subr.mxu0 0.0
    %348 = vmatpush1.msra.mxu0 0.0
    %349 = vmatprep.subr.mxu0 0.0
    %350 = vmatpush1.msra.mxu0 0.0
    %351 = vmatprep.subr.mxu0 0.0
    %352 = vmatpush1.msra.mxu0 0.0
    %353 = vmatprep.subr.mxu0 0.0
    %354 = vmatpush1.msra.mxu0 0.0
    %355 = vmatprep.subr.mxu0 0.0
    %356 = vmatpush1.msra.mxu0 0.0
    %357 = vmatprep.subr.mxu0 0.0
    %358 = vmatpush1.msra.mxu0 0.0
    %359 = vmatprep.subr.mxu0 0.0
    %360 = vmatpush1.msra.mxu0 0.0
    %361 = vmatprep.subr.mxu0 0.0
    %362 = vmatpush1.msra.mxu0 %v325
    %363 = vmatprep.subr.mxu0 0.0
    %364 = vmatpush1.msra.mxu0 %v324
    %365 = vmatprep.subr.mxu0 0.0
    %366 = vmatpush1.msra.mxu0 %v323
    %367 = vmatprep.subr.mxu0 0.0
    %368 = vmatpush1.msra.mxu0 %v322
    %369 = vmatprep.subr.mxu0 0.0
    %370 = vmatpush2.msra.mxu0 0.0
    %371 = vmatprep.subr.mxu0 0.0
    %372 = vmatpush2.msra.mxu0 0.0
    %373 = vmatprep.subr.mxu0 0.0
    %374 = vmatpush2.msra.mxu0 0.0
    %375 = vmatprep.subr.mxu0 0.0
    %376 = vmatpush2.msra.mxu0 0.0
    %377 = vmatprep.subr.mxu0 0.0
    %378 = vmatpush2.msra.mxu0 0.0
    %379 = vmatprep.subr.mxu0 0.0
    %380 = vmatpush2.msra.mxu0 0.0
    %381 = vmatprep.subr.mxu0 0.0
    %382 = vmatpush2.msra.mxu0 0.0
    %383 = vmatprep.subr.mxu0 0.0
    %384 = vmatpush2.msra.mxu0 0.0
    %385 = vmatprep.subr.mxu0 0.0
    %386 = vmatpush2.msra.mxu0 0.0
    %387 = vmatprep.subr.mxu0 0.0
    %388 = vmatpush2.msra.mxu0 0.0
    %389 = vmatprep.subr.mxu0 0.0
    %390 = vmatpush2.msra.mxu0 0.0
    %391 = vmatprep.subr.mxu0 0.0
    %392 = vmatpush2.msra.mxu0 0.0
    %393 = vmatprep.subr.mxu0 0.0
    %394 = vmatpush2.msra.mxu0 0.0
    %395 = vmatprep.subr.mxu0 0.0
    %396 = vmatpush2.msra.mxu0 0.0
    %397 = vmatprep.subr.mxu0 0.0
    %398 = vmatpush2.msra.mxu0 0.0
    %399 = vmatprep.subr.mxu0 0.0
    %400 = vmatpush2.msra.mxu0 0.0
    %401 = vmatprep.mubr.f32.mxu0 0.0
    %402 = vmatmul.mubr.f32.gmra.mxu0 %v335
    %v403 = vpop.f32.mrf.mxu0
    %v404 = vadd.f32 %v333, %v403
    %v405 = vpop.f32.mrf.mxu0
    %406 = vdwg.mxu0
    %v407 = vmul.f32 %v404, %v404
    %v409 = vsel %vm130, %v404, 0
    %v412 = vsel %vm130, %v407, 0
    %414 = vmatprep.subr.mxu0 0.0
    %415 = vmatpush1.msra.mxu0 0.0
    %416 = vmatprep.subr.mxu0 0.0
    %417 = vmatpush1.msra.mxu0 0.0
    %418 = vmatprep.subr.mxu0 0.0
    %419 = vmatpush1.msra.mxu0 0.0
    %420 = vmatprep.subr.mxu0 0.0
    %421 = vmatpush1.msra.mxu0 0.0
    %422 = vmatprep.subr.mxu0 0.0
    %423 = vmatpush1.msra.mxu0 0.0
    %424 = vmatprep.subr.mxu0 0.0
    %425 = vmatpush1.msra.mxu0 0.0
    %426 = vmatprep.subr.mxu0 0.0
    %427 = vmatpush1.msra.mxu0 0.0
    %428 = vmatprep.subr.mxu0 0.0
    %429 = vmatpush1.msra.mxu0 0.0
    %430 = vmatprep.subr.mxu0 0.0
    %431 = vmatpush1.msra.mxu0 0.0
    %432 = vmatprep.subr.mxu0 0.0
    %433 = vmatpush1.msra.mxu0 0.0
    %434 = vmatprep.subr.mxu0 0.0
    %435 = vmatpush1.msra.mxu0 0.0
    %436 = vmatprep.subr.mxu0 0.0
    %437 = vmatpush1.msra.mxu0 0.0
    %438 = vmatprep.subr.mxu0 0.0
    %439 = vmatpush1.msra.mxu0 %v36
    %440 = vmatprep.subr.mxu0 0.0
    %441 = vmatpush1.msra.mxu0 %v35
    %442 = vmatprep.subr.mxu0 0.0
    %443 = vmatpush1.msra.mxu0 %v34
    %444 = vmatprep.subr.mxu0 0.0
    %445 = vmatpush1.msra.mxu0 %v33
    %446 = vmatprep.subr.mxu0 0.0
    %447 = vmatpush2.msra.mxu0 0.0
    %448 = vmatprep.subr.mxu0 0.0
    %449 = vmatpush2.msra.mxu0 0.0
    %450 = vmatprep.subr.mxu0 0.0
    %451 = vmatpush2.msra.mxu0 0.0
    %452 = vmatprep.subr.mxu0 0.0
    %453 = vmatpush2.msra.mxu0 0.0
    %454 = vmatprep.subr.mxu0 0.0
    %455 = vmatpush2.msra.mxu0 0.0
    %456 = vmatprep.subr.mxu0 0.0
    %457 = vmatpush2.msra.mxu0 0.0
    %458 = vmatprep.subr.mxu0 0.0
    %459 = vmatpush2.msra.mxu0 0.0
    %460 = vmatprep.subr.mxu0 0.0
    %461 = vmatpush2.msra.mxu0 0.0
    %462 = vmatprep.subr.mxu0 0.0
    %463 = vmatpush2.msra.mxu0 0.0
    %464 = vmatprep.subr.mxu0 0.0
    %465 = vmatpush2.msra.mxu0 0.0
    %466 = vmatprep.subr.mxu0 0.0
    %467 = vmatpush2.msra.mxu0 0.0
    %468 = vmatprep.subr.mxu0 0.0
    %469 = vmatpush2.msra.mxu0 0.0
    %470 = vmatprep.subr.mxu0 0.0
    %471 = vmatpush2.msra.mxu0 0.0
    %472 = vmatprep.subr.mxu0 0.0
    %473 = vmatpush2.msra.mxu0 0.0
    %474 = vmatprep.subr.mxu0 0.0
    %475 = vmatpush2.msra.mxu0 0.0
    %476 = vmatprep.subr.mxu0 0.0
    %477 = vmatpush2.msra.mxu0 0.0
    %478 = vmatprep.mubr.f32.mxu0 0.0
    %479 = vmatmul.mubr.f32.gmra.mxu0 %v409
    %v480 = vpop.f32.mrf.mxu0
    %v481 = vadd.f32 0.0, %v480
    %v482 = vpop.f32.mrf.mxu0
    %483 = vmatprep.mubr.f32.mxu0 0.0
    %484 = vmatmul.mubr.f32.gmra.mxu0 %v412
    %v485 = vpop.f32.mrf.mxu0
    %v486 = vadd.f32 0.0, %v485
    %v487 = vpop.f32.mrf.mxu0
    %488 = vdwg.mxu0
    %v490 = vsel %vm212, %v481, 0
    %v493 = vsel %vm212, %v486, 0
    %495 = vmatprep.subr.mxu0 0.0
    %496 = vmatpush1.msra.mxu0 0.0
    %497 = vmatprep.subr.mxu0 0.0
    %498 = vmatpush1.msra.mxu0 0.0
    %499 = vmatprep.subr.mxu0 0.0
    %500 = vmatpush1.msra.mxu0 0.0
    %501 = vmatprep.subr.mxu0 0.0
    %502 = vmatpush1.msra.mxu0 0.0
    %503 = vmatprep.subr.mxu0 0.0
    %504 = vmatpush1.msra.mxu0 0.0
    %505 = vmatprep.subr.mxu0 0.0
    %506 = vmatpush1.msra.mxu0 0.0
    %507 = vmatprep.subr.mxu0 0.0
    %508 = vmatpush1.msra.mxu0 0.0
    %509 = vmatprep.subr.mxu0 0.0
    %510 = vmatpush1.msra.mxu0 0.0
    %511 = vmatprep.subr.mxu0 0.0
    %512 = vmatpush1.msra.mxu0 0.0
    %513 = vmatprep.subr.mxu0 0.0
    %514 = vmatpush1.msra.mxu0 0.0
    %515 = vmatprep.subr.mxu0 0.0
    %516 = vmatpush1.msra.mxu0 0.0
    %517 = vmatprep.subr.mxu0 0.0
    %518 = vmatpush1.msra.mxu0 0.0
    %519 = vmatprep.subr.mxu0 0.0
    %520 = vmatpush1.msra.mxu0 0.0
    %521 = vmatprep.subr.mxu0 0.0
    %522 = vmatpush1.msra.mxu0 0.0
    %523 = vmatprep.subr.mxu0 0.0
    %524 = vmatpush1.msra.mxu0 0.0
    %525 = vmatprep.subr.mxu0 0.0
    %526 = vmatpush1.msra.mxu0 %v221
    %527 = vmatprep.subr.mxu0 0.0
    %528 = vmatpush2.msra.mxu0 0.0
    %529 = vmatprep.subr.mxu0 0.0
    %530 = vmatpush2.msra.mxu0 0.0
    %531 = vmatprep.subr.mxu0 0.0
    %532 = vmatpush2.msra.mxu0 0.0
    %533 = vmatprep.subr.mxu0 0.0
    %534 = vmatpush2.msra.mxu0 0.0
    %535 = vmatprep.subr.mxu0 0.0
    %536 = vmatpush2.msra.mxu0 0.0
    %537 = vmatprep.subr.mxu0 0.0
    %538 = vmatpush2.msra.mxu0 0.0
    %539 = vmatprep.subr.mxu0 0.0
    %540 = vmatpush2.msra.mxu0 0.0
    %541 = vmatprep.subr.mxu0 0.0
    %542 = vmatpush2.msra.mxu0 0.0
    %543 = vmatprep.subr.mxu0 0.0
    %544 = vmatpush2.msra.mxu0 0.0
    %545 = vmatprep.subr.mxu0 0.0
    %546 = vmatpush2.msra.mxu0 0.0
    %547 = vmatprep.subr.mxu0 0.0
    %548 = vmatpush2.msra.mxu0 0.0
    %549 = vmatprep.subr.mxu0 0.0
    %550 = vmatpush2.msra.mxu0 0.0
    %551 = vmatprep.subr.mxu0 0.0
    %552 = vmatpush2.msra.mxu0 0.0
    %553 = vmatprep.subr.mxu0 0.0
    %554 = vmatpush2.msra.mxu0 0.0
    %555 = vmatprep.subr.mxu0 0.0
    %556 = vmatpush2.msra.mxu0 0.0
    %557 = vmatprep.subr.mxu0 0.0
    %558 = vmatpush2.msra.mxu0 0.0
    %559 = vmatprep.mubr.f32.mxu0 0.0
    %560 = vmatmul.mubr.f32.gmra.mxu0 %v490
    %v561 = vpop.f32.mrf.mxu0
    %v562 = vadd.f32 0.0, %v561
    %v563 = vpop.f32.mrf.mxu0
    %564 = vmatprep.mubr.f32.mxu0 0.0
    %565 = vmatmul.mubr.f32.gmra.mxu0 %v493
    %v566 = vpop.f32.mrf.mxu0
    %v567 = vadd.f32 0.0, %v566
    %v568 = vpop.f32.mrf.mxu0
    %569 = vdwg.mxu0
    %v570 = vmul.f32 %v562, %v562
    %v571 = vsub.f32 %v567, %v570
    %v572 = vmax.f32 %v571, 0.0
    %v573 = vsub.f32 %v404, %v562
    %v574 = vadd.f32 %v572, 1e-05
    %v575 = vrsqrt.pop %v574
    %v576 = vmul.f32 %v573, %v575
    %v577 = vlaneseq
    %v578 = vshrl.u32 %v577, 7
    %v579 = vsub.s32 0, %v578
    %v580 = vrot.slane %v327, %v579
    %v581 = vmul.f32 %v576, %v580
    %v582 = vlaneseq
    %v583 = vshrl.u32 %v582, 7
    %v584 = vsub.s32 0, %v583
    %v585 = vrot.slane %v328, %v584
    %v586 = vadd.f32 %v581, %v585
    %vm587 = vcmp.ge.f32.partialorder %v586, 0.0
    %v588 = vlaneseq
    %v589 = vshrl.u32 %v588, 7
    %v590 = vsub.s32 0, %v589
    %v591 = vrot.slane %v329, %v590
    %v592 = vmul.f32 %v591, %v586
    %v593 = vsel %vm587, %v586, %v592
    %v594 = vld [vmem:[%s5] sm:$0xff]
    %v595 = vld [vmem:[%s5 + $0x8] sm:$0xff]
    %v596 = vld [vmem:[%s5 + $0x10] sm:$0xff]
    %v597 = vld [vmem:[%s5 + $0x18] sm:$0xff]
    %v598 = vld [vmem:[%s6] sm:$0x1]
    %v600 = vlaneseq
    %v601 = vshrl.u32 %v600, 7
    %v602 = vsub.s32 0, %v601
    %v603 = vrot.slane %v598, %v602
    %v606 = vsel %vm130, %v593, 0
    %608 = vmatprep.subr.mxu0 0.0
    %609 = vmatpush1.msra.mxu0 0.0
    %610 = vmatprep.subr.mxu0 0.0
    %611 = vmatpush1.msra.mxu0 0.0
    %612 = vmatprep.subr.mxu0 0.0
    %613 = vmatpush1.msra.mxu0 0.0
    %614 = vmatprep.subr.mxu0 0.0
    %615 = vmatpush1.msra.mxu0 0.0
    %616 = vmatprep.subr.mxu0 0.0
    %617 = vmatpush1.msra.mxu0 0.0
    %618 = vmatprep.subr.mxu0 0.0
    %619 = vmatpush1.msra.mxu0 0.0
    %620 = vmatprep.subr.mxu0 0.0
    %621 = vmatpush1.msra.mxu0 0.0
    %622 = vmatprep.subr.mxu0 0.0
    %623 = vmatpush1.msra.mxu0 0.0
    %624 = vmatprep.subr.mxu0 0.0
    %625 = vmatpush1.msra.mxu0 0.0
    %626 = vmatprep.subr.mxu0 0.0
    %627 = vmatpush1.msra.mxu0 0.0
    %628 = vmatprep.subr.mxu0 0.0
    %629 = vmatpush1.msra.mxu0 0.0
    %630 = vmatprep.subr.mxu0 0.0
    %631 = vmatpush1.msra.mxu0 0.0
    %632 = vmatprep.subr.mxu0 0.0
    %633 = vmatpush1.msra.mxu0 %v597
    %634 = vmatprep.subr.mxu0 0.0
    %635 = vmatpush1.msra.mxu0 %v596
    %636 = vmatprep.subr.mxu0 0.0
    %637 = vmatpush1.msra.mxu0 %v595
    %638 = vmatprep.subr.mxu0 0.0
    %639 = vmatpush1.msra.mxu0 %v594
    %640 = vmatprep.subr.mxu0 0.0
    %641 = vmatpush2.msra.mxu0 0.0
    %642 = vmatprep.subr.mxu0 0.0
    %643 = vmatpush2.msra.mxu0 0.0
    %644 = vmatprep.subr.mxu0 0.0
    %645 = vmatpush2.msra.mxu0 0.0
    %646 = vmatprep.subr.mxu0 0.0
    %647 = vmatpush2.msra.mxu0 0.0
    %648 = vmatprep.subr.mxu0 0.0
    %649 = vmatpush2.msra.mxu0 0.0
    %650 = vmatprep.subr.mxu0 0.0
    %651 = vmatpush2.msra.mxu0 0.0
    %652 = vmatprep.subr.mxu0 0.0
    %653 = vmatpush2.msra.mxu0 0.0
    %654 = vmatprep.subr.mxu0 0.0
    %655 = vmatpush2.msra.mxu0 0.0
    %656 = vmatprep.subr.mxu0 0.0
    %657 = vmatpush2.msra.mxu0 0.0
    %658 = vmatprep.subr.mxu0 0.0
    %659 = vmatpush2.msra.mxu0 0.0
    %660 = vmatprep.subr.mxu0 0.0
    %661 = vmatpush2.msra.mxu0 0.0
    %662 = vmatprep.subr.mxu0 0.0
    %663 = vmatpush2.msra.mxu0 0.0
    %664 = vmatprep.subr.mxu0 0.0
    %665 = vmatpush2.msra.mxu0 0.0
    %666 = vmatprep.subr.mxu0 0.0
    %667 = vmatpush2.msra.mxu0 0.0
    %668 = vmatprep.subr.mxu0 0.0
    %669 = vmatpush2.msra.mxu0 0.0
    %670 = vmatprep.subr.mxu0 0.0
    %671 = vmatpush2.msra.mxu0 0.0
    %672 = vmatprep.mubr.f32.mxu0 0.0
    %673 = vmatmul.mubr.f32.gmra.mxu0 %v606
    %v674 = vpop.f32.mrf.mxu0
    %v675 = vadd.f32 %v603, %v674
    %v676 = vpop.f32.mrf.mxu0
    %677 = vdwg.mxu0
    %678 = vst [vmem:[#allocation2] sm:$0xff] %v675
    // Predicated region
    $region38: #{tpu_custom_call.1} parent=1 // pred_check
      _
    $region39: #{tpu_custom_call.1} parent=1 // pred_check_branch
      %680 = sbr.rel (0) target = $region41
    $region40: #{tpu_custom_call.1} parent=1 // pred_region
      %s682 = ssub.s32 128, 128
      %683 = vsyncadd [#allocation3], %s682
      %s685 = sshll.u32 [#allocation2], 4
      %s686 = int_to_ptr.vmem [resolvable:$true] %s685
      %688 = dma.vmem_to_hbm [thread:$0]  %s686, 128, %s9, [#allocation3]
    $region41: #{tpu_custom_call.1} parent=1 // pred_fallthru
      _
    // Predicated region
    $region42: #{tpu_custom_call.1} parent=1 // pred_check
      _
    $region43: #{tpu_custom_call.1} parent=1 // pred_check_branch
      %690 = sbr.rel (0) target = $region45
    $region44: #{tpu_custom_call.1} parent=1 // pred_region
      %691 = dma.done [#allocation3], 128
    $region45: #{tpu_custom_call.1} parent=1 // pred_fallthru
      _
    %692 = vsyncpa [#allocation3], 1

</llo_original>
